<compile_context>
chip_gen: v7x
topology: tpu7x:2x2x1
jax: 0.10.0
libtpu: 0.0.40
codegen_flags: <defaults>
</compile_context>

<pallas_src>
import functools
import math

import jax
import jax.numpy as jnp
from jax import lax
from jax.experimental import pallas as pl
from jax.experimental.pallas import tpu as pltpu


def _fcn_kernel(x_ref, w1_ref, w2_ref, out_ref, act_ref, *, scale1, scale2,
                mm_dtype):
    # x_ref  : (TB, D)      VMEM   f32 (input streamed as-is from HBM)
    # w1_ref : (width, D)   VMEM   f32 or bf16 (resident across batch tiles)
    # w2_ref : (1, width)   VMEM   f32 (resident)
    # out_ref: (TB, 1)      VMEM   f32
    # act_ref: (TB, width)  VMEM   f32
    x = x_ref[...]
    w1 = w1_ref[...]
    w2 = w2_ref[...]

    # Optional in-kernel cast of the x tile (VPU, hidden under the DMA);
    # keeps the HBM x stream at its native dtype.
    if x.dtype != mm_dtype:
        x = x.astype(mm_dtype)

    # fc1 on the MXU: contract dim 1 of x with dim 1 of w1 -> (TB, width).
    # No transpose of w1 is materialized; accumulation is f32.
    d = lax.dot_general(
        x, w1,
        dimension_numbers=(((1,), (1,)), ((), ())),
        preferred_element_type=jnp.float32,
    )

    # ReLU first, then scale (scale1 > 0 so ReLU commutes with the scale).
    r = jnp.maximum(d, 0.0)
    act_ref[...] = (scale1 * r).astype(act_ref.dtype)

    # fc2: output dim is 1, so skip the MXU -- VPU multiply with the broadcast
    # w2 row + XLU lane reduction.  Fold scale1*scale2 into the (TB, 1) result.
    out = jnp.sum(r * w2.astype(jnp.float32), axis=-1, keepdims=True)
    out_ref[...] = ((scale1 * scale2) * out).astype(out_ref.dtype)


def _choose_batch_tile(b, d, width, x_itemsize, w1_itemsize,
                       budget_bytes=48 << 20, tb_cap=1024):
    """Pick a batch tile that keeps double-buffered streams under `budget_bytes`.

    Budget accounts for: 2x double-buffered x tile, resident W1, double-buffered
    act output tile, double-buffered (lane-padded) out tile, and the live f32
    temporary r (TB x width).  Conservative enough for v7x's 64 MiB VMEM.
    """
    per_row = (2 * d * x_itemsize        # double-buffered x tile
               + 2 * width * 4           # double-buffered act output tile
               + 1 * width * 4           # live f32 temporary r
               + 2 * 128 * 4)            # double-buffered out tile (lane pad)
    fixed = width * d * w1_itemsize + 128 * 4   # resident W1 + w2 row
    tb = (budget_bytes - fixed) // per_row
    tb = int(max(8, min(tb, tb_cap)))
    tb = (tb // 8) * 8
    if b <= tb:
        return b   # single tile; block equals full array dims (layout-exempt)
    return tb


def fcn_forward(x, w1, w2, *, mm_dtype=jnp.float32):
    """Pallas forward pass of FCN.

    Args:
      x : (B, C, H, W) or (B, D) float32 input (flattened internally).
      w1: (width, input_dim) float32  -- fc1.weight
      w2: (1, width) float32          -- fc2.weight
      mm_dtype: dtype used for the fc1 matmul operands.  jnp.bfloat16 halves
        the resident-W1 bytes (cast once in the wrapper) and casts the x tile
        in-kernel; f32 accumulation is kept.  Default f32 matches PyTorch.

    Returns:
      (out, activation): shapes (B, 1) and (B, width), matching PyTorch.
    """
    b = x.shape[0]
    x2d = x.reshape(b, -1)
    d = x2d.shape[1]
    width = w1.shape[0]
    assert w1.shape == (width, d)
    assert w2.shape == (1, width)

    scale1 = math.sqrt(1.0 / d)
    scale2 = math.sqrt(1.0 / width)

    # Cast ONLY the weight in the wrapper (reused across all batch tiles); the
    # x stream stays in its native dtype and is cast in-kernel if needed.
    if mm_dtype != w1.dtype:
        w1 = w1.astype(mm_dtype)

    tb = _choose_batch_tile(b, d, width,
                            x_itemsize=x2d.dtype.itemsize,
                            w1_itemsize=w1.dtype.itemsize)
    grid = (pl.cdiv(b, tb),)

    # Explicit scoped-VMEM limit: estimated usage with headroom, clamped to a
    # range that is safe on v5e (16 MiB scoped default) through v7x (64 MiB
    # physical).
    vmem_estimate = (2 * tb * d * x2d.dtype.itemsize
                     + width * d * w1.dtype.itemsize
                     + 2 * tb * width * 4
                     + tb * width * 4
                     + 2 * tb * 128 * 4
                     + 128 * 4)
    vmem_limit = int(min(max(2 * vmem_estimate, 32 << 20), 56 << 20))

    kernel = functools.partial(_fcn_kernel, scale1=scale1, scale2=scale2,
                               mm_dtype=mm_dtype)

    out, act = pl.pallas_call(
        kernel,
        out_shape=(
            jax.ShapeDtypeStruct((b, 1), jnp.float32),
            jax.ShapeDtypeStruct((b, width), jnp.float32),
        ),
        grid=grid,
        in_specs=[
            # x: streamed batch tile (double-buffered by the pipeline).
            pl.BlockSpec((tb, d), lambda i: (i, 0)),
            # W1: constant block index -> DMA'd once, VMEM-resident.
            pl.BlockSpec((width, d), lambda i: (0, 0)),
            # W2: constant block index -> resident.
            pl.BlockSpec((1, width), lambda i: (0, 0)),
        ],
        out_specs=(
            pl.BlockSpec((tb, 1), lambda i: (i, 0)),
            pl.BlockSpec((tb, width), lambda i: (i, 0)),
        ),
        compiler_params=pltpu.CompilerParams(
            dimension_semantics=("parallel",),
            vmem_limit_bytes=vmem_limit,
        ),
    )(x2d, w1, w2)
    return out, act


def fcn_forward_ref(x, w1, w2):
    """Pure-JAX reference, mirrors the PyTorch forward exactly."""
    b = x.shape[0]
    x2d = x.reshape(b, -1)
    d = x2d.shape[1]
    width = w1.shape[0]
    pre = math.sqrt(1.0 / d) * (x2d @ w1.T)
    act = jnp.maximum(pre, 0.0)
    out = math.sqrt(1.0 / width) * (act @ w2.T)
    return out, act


if __name__ == "__main__":
    key = jax.random.PRNGKey(0)
    kx, k1, k2 = jax.random.split(key, 3)

    # Small shapes consistent with x.view(B, -1): NCHW image flattened.
    B, C, H, W = 2, 4, 16, 16
    input_dim = C * H * W   # 1024
    width = 32

    x = jax.random.normal(kx, (B, C, H, W), dtype=jnp.float32)
    # Weight init matching nn.init.normal_(w, 0, 1) semantics.
    w1 = jax.random.normal(k1, (width, input_dim), dtype=jnp.float32)
    w2 = jax.random.normal(k2, (1, width), dtype=jnp.float32)

    out, act = fcn_forward(x, w1, w2)
    out = jax.block_until_ready(out)
    act = jax.block_until_ready(act)

    out_ref, act_ref = fcn_forward_ref(x, w1, w2)
    assert out.shape == (B, 1) and act.shape == (B, width)
    assert jnp.allclose(out, out_ref, atol=1e-4, rtol=1e-4)
    assert jnp.allclose(act, act_ref, atol=1e-4, rtol=1e-4)

    print("KERNEL_OK")
</pallas_src>

<mosaic_0001>
module attributes {stable_mosaic.version = 11 : i64} {
  func.func @_fcn_kernel(%arg0: i32, %arg1: memref<2x1024xf32, #tpu.memory_space<vmem>>, %arg2: memref<32x1024xf32, #tpu.memory_space<vmem>>, %arg3: memref<1x32xf32, #tpu.memory_space<vmem>>, %arg4: memref<2x1xf32, #tpu.memory_space<vmem>>, %arg5: memref<2x32xf32, #tpu.memory_space<vmem>>) attributes {dimension_semantics = [#tpu.dimension_semantics<parallel>], iteration_bounds = array<i64: 1>, scalar_prefetch = 0 : i64, scratch_operands = 0 : i64, tpu.core_type = #tpu.core_type<tc>, window_params = [{transform_indices = @transform_0, window_bounds = array<i64: 2, 1024>}, {pipeline_mode = #tpu.pipeline_mode<synchronous>, transform_indices = @transform_1, window_bounds = array<i64: 32, 1024>}, {pipeline_mode = #tpu.pipeline_mode<synchronous>, transform_indices = @transform_2, window_bounds = array<i64: 1, 32>}, {transform_indices = @transform_3, window_bounds = array<i64: 2, 1>}, {transform_indices = @transform_4, window_bounds = array<i64: 2, 32>}]} {
    %c0 = arith.constant 0 : index
    %c0_0 = arith.constant 0 : index
    %0 = vector.load %arg1[%c0, %c0_0] : memref<2x1024xf32, #tpu.memory_space<vmem>>, vector<2x1024xf32>
    %c0_1 = arith.constant 0 : index
    %c0_2 = arith.constant 0 : index
    %1 = vector.load %arg2[%c0_1, %c0_2] : memref<32x1024xf32, #tpu.memory_space<vmem>>, vector<32x1024xf32>
    %c0_3 = arith.constant 0 : index
    %c0_4 = arith.constant 0 : index
    %2 = vector.load %arg3[%c0_3, %c0_4] : memref<1x32xf32, #tpu.memory_space<vmem>>, vector<1x32xf32>
    %cst = arith.constant dense<0.000000e+00> : vector<2x32xf32>
    %3 = tpu.matmul %0, %1, %cst {dimension_numbers = #tpu.dot_dimension_numbers<[1], [1], [0], [0], [0, 0, 1, 0], [], []>} : vector<2x1024xf32>, vector<32x1024xf32>, vector<2x32xf32> -> vector<2x32xf32>
    %cst_5 = arith.constant 0.000000e+00 : f32
    %4 = vector.broadcast %cst_5 : f32 to vector<2x32xf32>
    %5 = arith.maximumf %3, %4 : vector<2x32xf32>
    %cst_6 = arith.constant 3.125000e-02 : f32
    %6 = vector.broadcast %cst_6 : f32 to vector<2x32xf32>
    %7 = arith.mulf %6, %5 : vector<2x32xf32>
    %c0_7 = arith.constant 0 : index
    %c0_8 = arith.constant 0 : index
    %8 = vector.load %arg5[%c0_7, %c0_8] : memref<2x32xf32, #tpu.memory_space<vmem>>, vector<2x32xf32>
    tpu.vector_store %arg5[%c0_7, %c0_8], %7 {strides = array<i32>} : memref<2x32xf32, #tpu.memory_space<vmem>>, vector<2x32xf32>,
    %9 = vector.broadcast %2 : vector<1x32xf32> to vector<2x32xf32>
    %10 = arith.mulf %5, %9 : vector<2x32xf32>
    %cst_9 = arith.constant dense<0.000000e+00> : vector<2xf32>
    %11 = vector.multi_reduction <add>, %10, %cst_9 [1] : vector<2x32xf32> to vector<2xf32>
    %12 = vector.shape_cast %11 : vector<2xf32> to vector<2x1xf32>
    %cst_10 = arith.constant 0.00552427163 : f32
    %13 = vector.broadcast %cst_10 : f32 to vector<2x1xf32>
    %14 = arith.mulf %13, %12 : vector<2x1xf32>
    %c0_11 = arith.constant 0 : index
    %c0_12 = arith.constant 0 : index
    %15 = vector.load %arg4[%c0_11, %c0_12] : memref<2x1xf32, #tpu.memory_space<vmem>>, vector<2x1xf32>
    tpu.vector_store %arg4[%c0_11, %c0_12], %14 {strides = array<i32>} : memref<2x1xf32, #tpu.memory_space<vmem>>, vector<2x1xf32>,
    return
  }
  func.func @transform_0(%arg0: i32) -> (i32, i32) {
    %c0_i32 = arith.constant 0 : i32
    %c0_i32_0 = arith.constant 0 : i32
    return %arg0, %c0_i32 : i32, i32
  }
  func.func @transform_1(%arg0: i32) -> (i32, i32) {
    %c0_i32 = arith.constant 0 : i32
    %c0_i32_0 = arith.constant 0 : i32
    %c0_i32_1 = arith.constant 0 : i32
    return %c0_i32, %c0_i32_0 : i32, i32
  }
  func.func @transform_2(%arg0: i32) -> (i32, i32) {
    %c0_i32 = arith.constant 0 : i32
    %c0_i32_0 = arith.constant 0 : i32
    %c0_i32_1 = arith.constant 0 : i32
    return %c0_i32, %c0_i32_0 : i32, i32
  }
  func.func @transform_3(%arg0: i32) -> (i32, i32) {
    %c0_i32 = arith.constant 0 : i32
    %c0_i32_0 = arith.constant 0 : i32
    return %arg0, %c0_i32 : i32, i32
  }
  func.func @transform_4(%arg0: i32) -> (i32, i32) {
    %c0_i32 = arith.constant 0 : i32
    %c0_i32_0 = arith.constant 0 : i32
    return %arg0, %c0_i32 : i32, i32
  }
}

</mosaic_0001>

<llo_original>
// kernel: tpu_custom_call.1
$region0: #{tpu_custom_call.1}
  #allocation0 [shape = 'u32[]', space=smem, size = 0x4, offset = 0x4, fixed_abs, tag = 'smem constant byte address 0x4 - core index']
  #allocation1 [shape = 'u32[144,128]{1,0:T(1,128)}', space=vmem, size = 0x12000, scoped, tag = 'internal scratch']
  %s0 = inlined_call_operand.hbm [shape: f32[2,1024], index: 0, kind: input, shape index: {}]
  %s1 = inlined_call_operand.hbm [shape: f32[32,1024], index: 1, kind: input, shape index: {}]
  %s2 = inlined_call_operand.vmem [shape: f32[1,32], index: 2, kind: input, shape index: {}]
  %s3 = inlined_call_operand.vmem [shape: f32[2,1], index: 3, kind: output, shape index: {0}]
  %s4 = inlined_call_operand.hbm [shape: f32[2,32], index: 4, kind: output, shape index: {1}]
  %5 = xla_tuple %s3, %s4
  %s6 = sld [smem:[#allocation0]]
  $region38: #{tpu_custom_call.1} parent=0
    _
  %s8 = ssub.s32 1, %s6
  %s9 = scalar_select 0, %s8, %s6
  $region1: #{tpu_custom_call.1} parent=0
    #allocation2 [shape = 'u8[8192]{0}', space=vmem, size = 0x2000, scoped, tag = 'input window, operand 0, single buffered']
    #allocation3 [shape = 's32[1]{0}', space=sflag, size = 0x4, scoped, tag = 'scoped memory for tpu_custom_call.1']
    #allocation4 [shape = 's32[1]{0}', space=sflag, size = 0x4, scoped, tag = 'scoped memory for tpu_custom_call.1']
    #allocation5 [shape = 'u8[131072]{0}', space=vmem, size = 0x20000, scoped, tag = 'input window, operand 1, single buffered']
    #allocation6 [shape = 's32[1]{0}', space=sflag, size = 0x4, scoped, tag = 'scoped memory for tpu_custom_call.1']
    #allocation7 [shape = 'u8[1024]{0}', space=vmem, size = 0x400, scoped, tag = 'output window, operand 1, single buffered']
    %10 = vsyncpa [#allocation3], 0
    %11 = vsyncpa [#allocation6], 0
    %12 = vsyncpa [#allocation4], 0
    // Predicated region
    $region2: #{tpu_custom_call.1} parent=1 // pred_check
      _
    $region3: #{tpu_custom_call.1} parent=1 // pred_check_branch
      %14 = sbr.rel (0) target = $region5
    $region4: #{tpu_custom_call.1} parent=1 // pred_region
      %s16 = ssub.s32 256, 256
      %17 = vsyncadd [#allocation3], %s16
      %s19 = sshll.u32 [#allocation2], 4
      %s20 = int_to_ptr.vmem [resolvable:$true] %s19
      %22 = dma.hbm_to_vmem [thread:$0]  %s0, 256, %s20, [#allocation3]
    $region5: #{tpu_custom_call.1} parent=1 // pred_fallthru
      _
    // Predicated region
    $region6: #{tpu_custom_call.1} parent=1 // pred_check
      _
    $region7: #{tpu_custom_call.1} parent=1 // pred_check_branch
      %24 = sbr.rel (0) target = $region9
    $region8: #{tpu_custom_call.1} parent=1 // pred_region
      %s26 = ssub.s32 4096, 4096
      %27 = vsyncadd [#allocation6], %s26
      %s28 = sshll.u32 [#allocation5], 4
      %s29 = int_to_ptr.vmem [resolvable:$true] %s28
      %34 = dma.hbm_to_vmem [thread:$0]  %s1, 4096, %s29, [#allocation6], 1024, 1024, 64
    $region9: #{tpu_custom_call.1} parent=1 // pred_fallthru
      _
    // Predicated region
    $region10: #{tpu_custom_call.1} parent=1 // pred_check
      _
    $region11: #{tpu_custom_call.1} parent=1 // pred_check_branch
      %36 = sbr.rel (0) target = $region13
    $region12: #{tpu_custom_call.1} parent=1 // pred_region
      _
    $region13: #{tpu_custom_call.1} parent=1 // pred_fallthru
      _
    // Predicated region
    $region14: #{tpu_custom_call.1} parent=1 // pred_check
      _
    $region15: #{tpu_custom_call.1} parent=1 // pred_check_branch
      %38 = sbr.rel (0) target = $region17
    $region16: #{tpu_custom_call.1} parent=1 // pred_region
      %39 = dma.done [#allocation3], 256
    $region17: #{tpu_custom_call.1} parent=1 // pred_fallthru
      _
    // Predicated region
    $region18: #{tpu_custom_call.1} parent=1 // pred_check
      _
    $region19: #{tpu_custom_call.1} parent=1 // pred_check_branch
      %41 = sbr.rel (0) target = $region21
    $region20: #{tpu_custom_call.1} parent=1 // pred_region
      %42 = dma.done [#allocation6], 4096
    $region21: #{tpu_custom_call.1} parent=1 // pred_fallthru
      _
    %v43 = vld [vmem:[#allocation2] sm:$0xff]
    %v44 = vld [vmem:[#allocation2 + $0x8] sm:$0xff]
    %v45 = vld [vmem:[#allocation5] sm:$0xff]
    %v46 = vld [vmem:[#allocation5 + $0x8] sm:$0xff]
    %v47 = vld [vmem:[#allocation5 + $0x10] sm:$0xff]
    %v48 = vld [vmem:[#allocation5 + $0x18] sm:$0xff]
    %v49 = vld [vmem:[#allocation5 + $0x20] sm:$0xff]
    %v50 = vld [vmem:[#allocation5 + $0x28] sm:$0xff]
    %v51 = vld [vmem:[#allocation5 + $0x30] sm:$0xff]
    %v52 = vld [vmem:[#allocation5 + $0x38] sm:$0xff]
    %v53 = vld [vmem:[#allocation5 + $0x40] sm:$0xff]
    %v54 = vld [vmem:[#allocation5 + $0x48] sm:$0xff]
    %v55 = vld [vmem:[#allocation5 + $0x50] sm:$0xff]
    %v56 = vld [vmem:[#allocation5 + $0x58] sm:$0xff]
    %v57 = vld [vmem:[#allocation5 + $0x60] sm:$0xff]
    %v58 = vld [vmem:[#allocation5 + $0x68] sm:$0xff]
    %v59 = vld [vmem:[#allocation5 + $0x70] sm:$0xff]
    %v60 = vld [vmem:[#allocation5 + $0x78] sm:$0xff]
    %v61 = vld [vmem:[#allocation5 + $0x80] sm:$0xff]
    %v62 = vld [vmem:[#allocation5 + $0x88] sm:$0xff]
    %v63 = vld [vmem:[#allocation5 + $0x90] sm:$0xff]
    %v64 = vld [vmem:[#allocation5 + $0x98] sm:$0xff]
    %v65 = vld [vmem:[#allocation5 + $0xa0] sm:$0xff]
    %v66 = vld [vmem:[#allocation5 + $0xa8] sm:$0xff]
    %v67 = vld [vmem:[#allocation5 + $0xb0] sm:$0xff]
    %v68 = vld [vmem:[#allocation5 + $0xb8] sm:$0xff]
    %v69 = vld [vmem:[#allocation5 + $0xc0] sm:$0xff]
    %v70 = vld [vmem:[#allocation5 + $0xc8] sm:$0xff]
    %v71 = vld [vmem:[#allocation5 + $0xd0] sm:$0xff]
    %v72 = vld [vmem:[#allocation5 + $0xd8] sm:$0xff]
    %v73 = vld [vmem:[#allocation5 + $0xe0] sm:$0xff]
    %v74 = vld [vmem:[#allocation5 + $0xe8] sm:$0xff]
    %v75 = vld [vmem:[#allocation5 + $0xf0] sm:$0xff]
    %v76 = vld [vmem:[#allocation5 + $0xf8] sm:$0xff]
    %v77 = vld [vmem:[%s2] sm:$0x1]
    %v80 = vcombine.high %v43, %v43
    %v82 = vunpack.c.l.s4 1983009808
    %v83 = vunpack.c.0.s8 %v82
    %v84 = vlaneseq
    %v85 = vshrl.u32 %v84, 7
    %v86 = vsub.s32 %v83, %v85
    %v87 = vrot.slane %v43, %v86
    %v89 = vunpack.c.l.s4 1983009808
    %v90 = vunpack.c.0.s8 %v89
    %v91 = vlaneseq
    %v92 = vshrl.u32 %v91, 7
    %v93 = vsub.s32 %v90, %v92
    %v94 = vrot.slane %v80, %v93
    %v95 = vcombine.high %v87, %v87
    %v96 = vcombine.high %v94, %v94
    %v97 = vcombine.high %v44, %v44
    %v99 = vunpack.c.l.s4 1983009808
    %v100 = vunpack.c.0.s8 %v99
    %v101 = vlaneseq
    %v102 = vshrl.u32 %v101, 7
    %v103 = vsub.s32 %v100, %v102
    %v104 = vrot.slane %v44, %v103
    %v106 = vunpack.c.l.s4 1983009808
    %v107 = vunpack.c.0.s8 %v106
    %v108 = vlaneseq
    %v109 = vshrl.u32 %v108, 7
    %v110 = vsub.s32 %v107, %v109
    %v111 = vrot.slane %v97, %v110
    %v112 = vcombine.high %v104, %v104
    %v113 = vcombine.high %v111, %v111
    %122 = vmatprep.subr.mxu0 %v46
    %123 = vmatpush1.xpose.msra.mxu0 %v45
    %124 = vmatprep.subr.mxu0 %v54
    %125 = vmatpush1.xpose.msra.mxu0 %v53
    %126 = vmatprep.subr.mxu0 %v62
    %127 = vmatpush1.xpose.msra.mxu0 %v61
    %128 = vmatprep.subr.mxu0 %v70
    %129 = vmatpush1.xpose.msra.mxu0 %v69
    %130 = vmatprep.subr.mxu0 0.0
    %131 = vmatpush1.xpose.msra.mxu0 0.0
    %132 = vmatprep.subr.mxu0 0.0
    %133 = vmatpush1.xpose.msra.mxu0 0.0
    %134 = vmatprep.subr.mxu0 0.0
    %135 = vmatpush1.xpose.msra.mxu0 0.0
    %136 = vmatprep.subr.mxu0 0.0
    %137 = vmatpush1.xpose.msra.mxu0 0.0
    %138 = vmatprep.subr.mxu0 0.0
    %139 = vmatpush1.xpose.msra.mxu0 0.0
    %140 = vmatprep.subr.mxu0 0.0
    %141 = vmatpush1.xpose.msra.mxu0 0.0
    %142 = vmatprep.subr.mxu0 0.0
    %143 = vmatpush1.xpose.msra.mxu0 0.0
    %144 = vmatprep.subr.mxu0 0.0
    %145 = vmatpush1.xpose.msra.mxu0 0.0
    %146 = vmatprep.subr.mxu0 0.0
    %147 = vmatpush1.xpose.msra.mxu0 0.0
    %148 = vmatprep.subr.mxu0 0.0
    %149 = vmatpush1.xpose.msra.mxu0 0.0
    %150 = vmatprep.subr.mxu0 0.0
    %151 = vmatpush1.xpose.msra.mxu0 0.0
    %152 = vmatprep.subr.mxu0 0.0
    %153 = vmatpush1.xpose.msra.mxu0 0.0
    %154 = vmatprep.subr.mxu0 0.0
    %155 = vmatpush1.xpose.msra.mxu0 0.0
    %156 = vmatprep.subr.mxu0 0.0
    %157 = vmatpush1.xpose.msra.mxu0 0.0
    %158 = vmatprep.subr.mxu0 0.0
    %159 = vmatpush1.xpose.msra.mxu0 0.0
    %160 = vmatprep.subr.mxu0 0.0
    %161 = vmatpush1.xpose.msra.mxu0 0.0
    %162 = vmatprep.subr.mxu0 0.0
    %163 = vmatpush1.xpose.msra.mxu0 0.0
    %164 = vmatprep.subr.mxu0 0.0
    %165 = vmatpush1.xpose.msra.mxu0 0.0
    %166 = vmatprep.subr.mxu0 0.0
    %167 = vmatpush1.xpose.msra.mxu0 0.0
    %168 = vmatprep.subr.mxu0 0.0
    %169 = vmatpush1.xpose.msra.mxu0 0.0
    %170 = vmatprep.subr.mxu0 0.0
    %171 = vmatpush1.xpose.msra.mxu0 0.0
    %172 = vmatprep.subr.mxu0 0.0
    %173 = vmatpush1.xpose.msra.mxu0 0.0
    %174 = vmatprep.subr.mxu0 0.0
    %175 = vmatpush1.xpose.msra.mxu0 0.0
    %176 = vmatprep.subr.mxu0 0.0
    %177 = vmatpush1.xpose.msra.mxu0 0.0
    %178 = vmatprep.subr.mxu0 0.0
    %179 = vmatpush1.xpose.msra.mxu0 0.0
    %180 = vmatprep.subr.mxu0 0.0
    %181 = vmatpush1.xpose.msra.mxu0 0.0
    %182 = vmatprep.subr.mxu0 0.0
    %183 = vmatpush1.xpose.msra.mxu0 0.0
    %184 = vmatprep.subr.mxu0 0.0
    %185 = vmatpush1.xpose.msra.mxu0 0.0
    %186 = vmatprep.mubr.f32.mxu0 %v95
    %187 = vmatmul.mubr.f32.gmra.mrb[0].mxu0 %v87
    %v188 = vpop.f32.mrb[0].mxu0
    %v189 = vadd.f32 0.0, %v188
    %v190 = vpop.f32.mrb[0].mxu0
    %191 = vdwg.mxu0
    %192 = vmatprep.subr.mxu0 %v48
    %193 = vmatpush1.xpose.msra.mxu0 %v47
    %194 = vmatprep.subr.mxu0 %v56
    %195 = vmatpush1.xpose.msra.mxu0 %v55
    %196 = vmatprep.subr.mxu0 %v64
    %197 = vmatpush1.xpose.msra.mxu0 %v63
    %198 = vmatprep.subr.mxu0 %v72
    %199 = vmatpush1.xpose.msra.mxu0 %v71
    %200 = vmatprep.subr.mxu0 0.0
    %201 = vmatpush1.xpose.msra.mxu0 0.0
    %202 = vmatprep.subr.mxu0 0.0
    %203 = vmatpush1.xpose.msra.mxu0 0.0
    %204 = vmatprep.subr.mxu0 0.0
    %205 = vmatpush1.xpose.msra.mxu0 0.0
    %206 = vmatprep.subr.mxu0 0.0
    %207 = vmatpush1.xpose.msra.mxu0 0.0
    %208 = vmatprep.subr.mxu0 0.0
    %209 = vmatpush1.xpose.msra.mxu0 0.0
    %210 = vmatprep.subr.mxu0 0.0
    %211 = vmatpush1.xpose.msra.mxu0 0.0
    %212 = vmatprep.subr.mxu0 0.0
    %213 = vmatpush1.xpose.msra.mxu0 0.0
    %214 = vmatprep.subr.mxu0 0.0
    %215 = vmatpush1.xpose.msra.mxu0 0.0
    %216 = vmatprep.subr.mxu0 0.0
    %217 = vmatpush1.xpose.msra.mxu0 0.0
    %218 = vmatprep.subr.mxu0 0.0
    %219 = vmatpush1.xpose.msra.mxu0 0.0
    %220 = vmatprep.subr.mxu0 0.0
    %221 = vmatpush1.xpose.msra.mxu0 0.0
    %222 = vmatprep.subr.mxu0 0.0
    %223 = vmatpush1.xpose.msra.mxu0 0.0
    %224 = vmatprep.subr.mxu0 0.0
    %225 = vmatpush1.xpose.msra.mxu0 0.0
    %226 = vmatprep.subr.mxu0 0.0
    %227 = vmatpush1.xpose.msra.mxu0 0.0
    %228 = vmatprep.subr.mxu0 0.0
    %229 = vmatpush1.xpose.msra.mxu0 0.0
    %230 = vmatprep.subr.mxu0 0.0
    %231 = vmatpush1.xpose.msra.mxu0 0.0
    %232 = vmatprep.subr.mxu0 0.0
    %233 = vmatpush1.xpose.msra.mxu0 0.0
    %234 = vmatprep.subr.mxu0 0.0
    %235 = vmatpush1.xpose.msra.mxu0 0.0
    %236 = vmatprep.subr.mxu0 0.0
    %237 = vmatpush1.xpose.msra.mxu0 0.0
    %238 = vmatprep.subr.mxu0 0.0
    %239 = vmatpush1.xpose.msra.mxu0 0.0
    %240 = vmatprep.subr.mxu0 0.0
    %241 = vmatpush1.xpose.msra.mxu0 0.0
    %242 = vmatprep.subr.mxu0 0.0
    %243 = vmatpush1.xpose.msra.mxu0 0.0
    %244 = vmatprep.subr.mxu0 0.0
    %245 = vmatpush1.xpose.msra.mxu0 0.0
    %246 = vmatprep.subr.mxu0 0.0
    %247 = vmatpush1.xpose.msra.mxu0 0.0
    %248 = vmatprep.subr.mxu0 0.0
    %249 = vmatpush1.xpose.msra.mxu0 0.0
    %250 = vmatprep.subr.mxu0 0.0
    %251 = vmatpush1.xpose.msra.mxu0 0.0
    %252 = vmatprep.subr.mxu0 0.0
    %253 = vmatpush1.xpose.msra.mxu0 0.0
    %254 = vmatprep.subr.mxu0 0.0
    %255 = vmatpush1.xpose.msra.mxu0 0.0
    %256 = vmatprep.mubr.f32.mxu0 %v96
    %257 = vmatmul.mubr.f32.gmra.mrb[0].mxu0 %v94
    %v258 = vpop.f32.mrb[0].mxu0
    %v259 = vadd.f32 %v189, %v258
    %v260 = vpop.f32.mrb[0].mxu0
    %261 = vdwg.mxu0
    %262 = vmatprep.subr.mxu0 %v50
    %263 = vmatpush1.xpose.msra.mxu0 %v49
    %264 = vmatprep.subr.mxu0 %v58
    %265 = vmatpush1.xpose.msra.mxu0 %v57
    %266 = vmatprep.subr.mxu0 %v66
    %267 = vmatpush1.xpose.msra.mxu0 %v65
    %268 = vmatprep.subr.mxu0 %v74
    %269 = vmatpush1.xpose.msra.mxu0 %v73
    %270 = vmatprep.subr.mxu0 0.0
    %271 = vmatpush1.xpose.msra.mxu0 0.0
    %272 = vmatprep.subr.mxu0 0.0
    %273 = vmatpush1.xpose.msra.mxu0 0.0
    %274 = vmatprep.subr.mxu0 0.0
    %275 = vmatpush1.xpose.msra.mxu0 0.0
    %276 = vmatprep.subr.mxu0 0.0
    %277 = vmatpush1.xpose.msra.mxu0 0.0
    %278 = vmatprep.subr.mxu0 0.0
    %279 = vmatpush1.xpose.msra.mxu0 0.0
    %280 = vmatprep.subr.mxu0 0.0
    %281 = vmatpush1.xpose.msra.mxu0 0.0
    %282 = vmatprep.subr.mxu0 0.0
    %283 = vmatpush1.xpose.msra.mxu0 0.0
    %284 = vmatprep.subr.mxu0 0.0
    %285 = vmatpush1.xpose.msra.mxu0 0.0
    %286 = vmatprep.subr.mxu0 0.0
    %287 = vmatpush1.xpose.msra.mxu0 0.0
    %288 = vmatprep.subr.mxu0 0.0
    %289 = vmatpush1.xpose.msra.mxu0 0.0
    %290 = vmatprep.subr.mxu0 0.0
    %291 = vmatpush1.xpose.msra.mxu0 0.0
    %292 = vmatprep.subr.mxu0 0.0
    %293 = vmatpush1.xpose.msra.mxu0 0.0
    %294 = vmatprep.subr.mxu0 0.0
    %295 = vmatpush1.xpose.msra.mxu0 0.0
    %296 = vmatprep.subr.mxu0 0.0
    %297 = vmatpush1.xpose.msra.mxu0 0.0
    %298 = vmatprep.subr.mxu0 0.0
    %299 = vmatpush1.xpose.msra.mxu0 0.0
    %300 = vmatprep.subr.mxu0 0.0
    %301 = vmatpush1.xpose.msra.mxu0 0.0
    %302 = vmatprep.subr.mxu0 0.0
    %303 = vmatpush1.xpose.msra.mxu0 0.0
    %304 = vmatprep.subr.mxu0 0.0
    %305 = vmatpush1.xpose.msra.mxu0 0.0
    %306 = vmatprep.subr.mxu0 0.0
    %307 = vmatpush1.xpose.msra.mxu0 0.0
    %308 = vmatprep.subr.mxu0 0.0
    %309 = vmatpush1.xpose.msra.mxu0 0.0
    %310 = vmatprep.subr.mxu0 0.0
    %311 = vmatpush1.xpose.msra.mxu0 0.0
    %312 = vmatprep.subr.mxu0 0.0
    %313 = vmatpush1.xpose.msra.mxu0 0.0
    %314 = vmatprep.subr.mxu0 0.0
    %315 = vmatpush1.xpose.msra.mxu0 0.0
    %316 = vmatprep.subr.mxu0 0.0
    %317 = vmatpush1.xpose.msra.mxu0 0.0
    %318 = vmatprep.subr.mxu0 0.0
    %319 = vmatpush1.xpose.msra.mxu0 0.0
    %320 = vmatprep.subr.mxu0 0.0
    %321 = vmatpush1.xpose.msra.mxu0 0.0
    %322 = vmatprep.subr.mxu0 0.0
    %323 = vmatpush1.xpose.msra.mxu0 0.0
    %324 = vmatprep.subr.mxu0 0.0
    %325 = vmatpush1.xpose.msra.mxu0 0.0
    %326 = vmatprep.mubr.f32.mxu0 %v112
    %327 = vmatmul.mubr.f32.gmra.mrb[0].mxu0 %v104
    %v328 = vpop.f32.mrb[0].mxu0
    %v329 = vadd.f32 %v259, %v328
    %v330 = vpop.f32.mrb[0].mxu0
    %331 = vdwg.mxu0
    %332 = vmatprep.subr.mxu0 %v52
    %333 = vmatpush1.xpose.msra.mxu0 %v51
    %334 = vmatprep.subr.mxu0 %v60
    %335 = vmatpush1.xpose.msra.mxu0 %v59
    %336 = vmatprep.subr.mxu0 %v68
    %337 = vmatpush1.xpose.msra.mxu0 %v67
    %338 = vmatprep.subr.mxu0 %v76
    %339 = vmatpush1.xpose.msra.mxu0 %v75
    %340 = vmatprep.subr.mxu0 0.0
    %341 = vmatpush1.xpose.msra.mxu0 0.0
    %342 = vmatprep.subr.mxu0 0.0
    %343 = vmatpush1.xpose.msra.mxu0 0.0
    %344 = vmatprep.subr.mxu0 0.0
    %345 = vmatpush1.xpose.msra.mxu0 0.0
    %346 = vmatprep.subr.mxu0 0.0
    %347 = vmatpush1.xpose.msra.mxu0 0.0
    %348 = vmatprep.subr.mxu0 0.0
    %349 = vmatpush1.xpose.msra.mxu0 0.0
    %350 = vmatprep.subr.mxu0 0.0
    %351 = vmatpush1.xpose.msra.mxu0 0.0
    %352 = vmatprep.subr.mxu0 0.0
    %353 = vmatpush1.xpose.msra.mxu0 0.0
    %354 = vmatprep.subr.mxu0 0.0
    %355 = vmatpush1.xpose.msra.mxu0 0.0
    %356 = vmatprep.subr.mxu0 0.0
    %357 = vmatpush1.xpose.msra.mxu0 0.0
    %358 = vmatprep.subr.mxu0 0.0
    %359 = vmatpush1.xpose.msra.mxu0 0.0
    %360 = vmatprep.subr.mxu0 0.0
    %361 = vmatpush1.xpose.msra.mxu0 0.0
    %362 = vmatprep.subr.mxu0 0.0
    %363 = vmatpush1.xpose.msra.mxu0 0.0
    %364 = vmatprep.subr.mxu0 0.0
    %365 = vmatpush1.xpose.msra.mxu0 0.0
    %366 = vmatprep.subr.mxu0 0.0
    %367 = vmatpush1.xpose.msra.mxu0 0.0
    %368 = vmatprep.subr.mxu0 0.0
    %369 = vmatpush1.xpose.msra.mxu0 0.0
    %370 = vmatprep.subr.mxu0 0.0
    %371 = vmatpush1.xpose.msra.mxu0 0.0
    %372 = vmatprep.subr.mxu0 0.0
    %373 = vmatpush1.xpose.msra.mxu0 0.0
    %374 = vmatprep.subr.mxu0 0.0
    %375 = vmatpush1.xpose.msra.mxu0 0.0
    %376 = vmatprep.subr.mxu0 0.0
    %377 = vmatpush1.xpose.msra.mxu0 0.0
    %378 = vmatprep.subr.mxu0 0.0
    %379 = vmatpush1.xpose.msra.mxu0 0.0
    %380 = vmatprep.subr.mxu0 0.0
    %381 = vmatpush1.xpose.msra.mxu0 0.0
    %382 = vmatprep.subr.mxu0 0.0
    %383 = vmatpush1.xpose.msra.mxu0 0.0
    %384 = vmatprep.subr.mxu0 0.0
    %385 = vmatpush1.xpose.msra.mxu0 0.0
    %386 = vmatprep.subr.mxu0 0.0
    %387 = vmatpush1.xpose.msra.mxu0 0.0
    %388 = vmatprep.subr.mxu0 0.0
    %389 = vmatpush1.xpose.msra.mxu0 0.0
    %390 = vmatprep.subr.mxu0 0.0
    %391 = vmatpush1.xpose.msra.mxu0 0.0
    %392 = vmatprep.subr.mxu0 0.0
    %393 = vmatpush1.xpose.msra.mxu0 0.0
    %394 = vmatprep.subr.mxu0 0.0
    %395 = vmatpush1.xpose.msra.mxu0 0.0
    %396 = vmatprep.mubr.f32.mxu0 %v113
    %397 = vmatmul.mubr.f32.gmra.mrb[0].mxu0 %v111
    %v398 = vpop.f32.mrb[0].mxu0
    %v399 = vadd.f32 %v329, %v398
    %v400 = vpop.f32.mrb[0].mxu0
    %401 = vdwg.mxu0
    %v402 = vmax.f32 %v399, 0.0
    %v403 = vmul.f32 %v402, 0.03125
    %vm404 = vcmask 254976
    %405 = vst.msk [vmem:[#allocation7] sm:$0x3] %vm404, %v403
    %v407 = vlaneseq
    %v408 = vshrl.u32 %v407, 7
    %v409 = vsub.s32 0, %v408
    %v410 = vrot.slane %v77, %v409
    %v412 = vmul.f32 %v402, %v410
    %v413 = vsel %vm404, %v412, 0.0
    %414 = vadd.xlane.f32.xlu0 %v413
    %v415 = vpop.xlane.xlu0 %414
    %v416 = vmul.f32 %v415, 0.0055242716
    %vm417 = vcmask 1024
    %418 = vst.msk [vmem:[%s3] sm:$0x3] %vm417, %v416
    // Predicated region
    $region22: #{tpu_custom_call.1} parent=1 // pred_check
      _
    $region23: #{tpu_custom_call.1} parent=1 // pred_check_branch
      %420 = sbr.rel (0) target = $region25
    $region24: #{tpu_custom_call.1} parent=1 // pred_region
      _
    $region25: #{tpu_custom_call.1} parent=1 // pred_fallthru
      _
    // Predicated region
    $region26: #{tpu_custom_call.1} parent=1 // pred_check
      _
    $region27: #{tpu_custom_call.1} parent=1 // pred_check_branch
      %422 = sbr.rel (0) target = $region29
    $region28: #{tpu_custom_call.1} parent=1 // pred_region
      %s424 = ssub.s32 32, 32
      %425 = vsyncadd [#allocation4], %s424
      %s427 = sshll.u32 [#allocation7], 4
      %s428 = int_to_ptr.vmem [resolvable:$true] %s427
      %430 = dma.vmem_to_hbm [thread:$0]  %s428, 32, %s4, [#allocation4]
    $region29: #{tpu_custom_call.1} parent=1 // pred_fallthru
      _
    // Predicated region
    $region30: #{tpu_custom_call.1} parent=1 // pred_check
      _
    $region31: #{tpu_custom_call.1} parent=1 // pred_check_branch
      %432 = sbr.rel (0) target = $region33
    $region32: #{tpu_custom_call.1} parent=1 // pred_region
      _
    $region33: #{tpu_custom_call.1} parent=1 // pred_fallthru
      _
    // Predicated region
    $region34: #{tpu_custom_call.1} parent=1 // pred_check
      _
    $region35: #{tpu_custom_call.1} parent=1 // pred_check_branch
      %434 = sbr.rel (0) target = $region37
    $region36: #{tpu_custom_call.1} parent=1 // pred_region
      %435 = dma.done [#allocation4], 32
    $region37: #{tpu_custom_call.1} parent=1 // pred_fallthru
      _
    %436 = vsyncpa [#allocation3], 1
    %437 = vsyncpa [#allocation6], 1
    %438 = vsyncpa [#allocation4], 1

</llo_original>
